<compile_context>
chip_gen: v7x
topology: tpu7x:2x2x1
jax: 0.10.0
libtpu: 0.0.40
codegen_flags: <defaults>
</compile_context>

<pallas_src>
import functools

import jax
import jax.numpy as jnp
from jax.experimental import pallas as pl
from jax.experimental.pallas import tpu as pltpu

NUM_HIDDEN_LAYERS = 6
NUM_NEURONS = 50            # logical width (matches the PyTorch module)
HIDDEN_PAD = 128            # (8,128)-clean padded width used inside the kernel
IN_FEATURES = 2             # logical input width (x, t)
IN_PAD = 8                  # padded input width -> single K=8 MXU pass
OUT_FEATURES = 1
# Batch tile: at 2048 rows each grid step does ~400 MFLOP, so the ~0.35 us
# per-step overhead is <5%.  VMEM per step: x 64 KB, h temps ~4-6 MB (f32),
# weights <0.5 MB — comfortably within scoped VMEM on v5e/v6e/v7x even with
# double buffering.
DEFAULT_BATCH_TILE = 2048


def _round_up(x, m):
    return (x + m - 1) // m * m


def _pinn_mlp_kernel(x_ref, wi_ref, bi_ref, wh_ref, bh_ref, wo_ref, bo_ref,
                     o_ref, *, num_hidden_layers):
    """One batch tile: Linear(2,H)+tanh -> L x (Linear(H,H)+tanh) -> Linear(H,1).

    Matmul operands are in the weights' dtype (f32 or bf16); accumulation,
    bias add and tanh stay f32 (preferred_element_type=f32).
    """
    cdt = wi_ref.dtype                                # matmul operand dtype

    # Input layer: one K=8 MXU pass (x / w_in zero-padded from 2 -> 8).
    x = x_ref[...].astype(cdt)                        # [TB, 8]
    h = jnp.tanh(
        jnp.dot(x, wi_ref[...], preferred_element_type=jnp.float32)
        + bi_ref[...])                                # [TB, H] f32

    # Hidden layers (static unroll — layer count is a compile-time constant).
    for l in range(num_hidden_layers):
        h = jnp.tanh(
            jnp.dot(h.astype(cdt), wh_ref[l],
                    preferred_element_type=jnp.float32)
            + bh_ref[l])                              # [TB, H] f32

    # Output layer (no activation).  1-lane output kept as-is on purpose.
    o_ref[...] = (
        jnp.dot(h.astype(cdt), wo_ref[...], preferred_element_type=jnp.float32)
        + bo_ref[...])                                # [TB, 1]


def pinn_forward(x, padded_params, *, batch_tile=DEFAULT_BATCH_TILE):
    """Run the PINN MLP forward pass with a batch-tiled Pallas TPU kernel.

    Args:
      x: [batch, 2] float32 coordinates (x, t).
      padded_params: output of pad_params() — weights padded / pre-transposed.
      batch_tile: rows of the batch processed per grid step.
    Returns:
      [batch, 1] float32 saturation prediction.
    """
    batch = x.shape[0]
    tb = min(batch_tile, _round_up(batch, 8))
    b_pad = _round_up(batch, tb)
    # Pad batch rows (sliced off at the end) and the feature dim 2 -> IN_PAD
    # (zero feature columns x zero weight rows -> no contribution).
    x = jnp.pad(x, ((0, b_pad - batch), (0, IN_PAD - IN_FEATURES)))
    grid = (pl.cdiv(b_pad, tb),)

    h = HIDDEN_PAD
    kernel = functools.partial(_pinn_mlp_kernel,
                               num_hidden_layers=NUM_HIDDEN_LAYERS)

    out = pl.pallas_call(
        kernel,
        out_shape=jax.ShapeDtypeStruct((b_pad, OUT_FEATURES), jnp.float32),
        grid=grid,
        in_specs=[
            # batch-tiled input
            pl.BlockSpec((tb, IN_PAD), lambda i: (i, 0)),
            # weights/biases: constant index maps -> stay VMEM-resident
            pl.BlockSpec((IN_PAD, h), lambda i: (0, 0)),
            pl.BlockSpec((1, h), lambda i: (0, 0)),
            pl.BlockSpec((NUM_HIDDEN_LAYERS, h, h), lambda i: (0, 0, 0)),
            pl.BlockSpec((NUM_HIDDEN_LAYERS, 1, h), lambda i: (0, 0, 0)),
            pl.BlockSpec((h, OUT_FEATURES), lambda i: (0, 0)),
            pl.BlockSpec((1, OUT_FEATURES), lambda i: (0, 0)),
        ],
        out_specs=pl.BlockSpec((tb, OUT_FEATURES), lambda i: (i, 0)),
        compiler_params=pltpu.CompilerParams(
            dimension_semantics=("parallel",),     # megacore sharding on v7x
            vmem_limit_bytes=64 << 20),            # headroom for big tiles
    )(x,
      padded_params["w_in"], padded_params["b_in"],
      padded_params["w_hid"], padded_params["b_hid"],
      padded_params["w_out"], padded_params["b_out"])

    return out[:batch]


def init_params(key):
    """Deterministic init mimicking nn.Linear's default U(-1/sqrt(fan_in), +).

    Stored as [in, out] (transposed vs. PyTorch's [out, in]); logical 50-wide.
    """
    keys = jax.random.split(key, 6)

    def uniform(k, shape, fan_in):
        bound = 1.0 / jnp.sqrt(jnp.asarray(fan_in, jnp.float32))
        return jax.random.uniform(k, shape, jnp.float32, -bound, bound)

    return {
        "w_in": uniform(keys[0], (IN_FEATURES, NUM_NEURONS), IN_FEATURES),
        "b_in": uniform(keys[1], (1, NUM_NEURONS), IN_FEATURES),
        "w_hid": uniform(keys[2], (NUM_HIDDEN_LAYERS, NUM_NEURONS, NUM_NEURONS),
                         NUM_NEURONS),
        "b_hid": uniform(keys[3], (NUM_HIDDEN_LAYERS, 1, NUM_NEURONS),
                         NUM_NEURONS),
        "w_out": uniform(keys[4], (NUM_NEURONS, OUT_FEATURES), NUM_NEURONS),
        "b_out": uniform(keys[5], (1, OUT_FEATURES), NUM_NEURONS),
    }


def pad_params(params, weight_dtype=jnp.float32):
    """Zero-pad hidden width to HIDDEN_PAD and input width to IN_PAD.

    Weights are cast to `weight_dtype` (f32 exact, or bf16 for ~2.5-3x MXU
    throughput with f32 accumulation); biases stay f32 (added post-accumulate).
    """
    h, n, l = HIDDEN_PAD, NUM_NEURONS, NUM_HIDDEN_LAYERS
    return {
        "w_in": jnp.zeros((IN_PAD, h), jnp.float32)
                   .at[:IN_FEATURES, :n].set(params["w_in"])
                   .astype(weight_dtype),
        "b_in": jnp.zeros((1, h), jnp.float32).at[:, :n].set(params["b_in"]),
        "w_hid": jnp.zeros((l, h, h), jnp.float32)
                    .at[:, :n, :n].set(params["w_hid"])
                    .astype(weight_dtype),
        "b_hid": jnp.zeros((l, 1, h), jnp.float32)
                    .at[:, :, :n].set(params["b_hid"]),
        "w_out": jnp.zeros((h, OUT_FEATURES), jnp.float32)
                    .at[:n, :].set(params["w_out"])
                    .astype(weight_dtype),
        "b_out": params["b_out"],
    }


def pinn_forward_ref(x, params):
    """Pure-JAX reference (unpadded, 50-wide, f32) for correctness checking."""
    hp = jax.lax.Precision.HIGHEST
    h = jnp.tanh(jnp.dot(x, params["w_in"], precision=hp) + params["b_in"])
    for l in range(NUM_HIDDEN_LAYERS):
        h = jnp.tanh(jnp.dot(h, params["w_hid"][l], precision=hp)
                     + params["b_hid"][l])
    return jnp.dot(h, params["w_out"], precision=hp) + params["b_out"]


if __name__ == "__main__":
    key = jax.random.PRNGKey(0)
    k_params, k_x1, k_x2 = jax.random.split(key, 3)
    params = init_params(k_params)
    padded_f32 = pad_params(params, jnp.float32)
    padded_bf16 = pad_params(params, jnp.bfloat16)

    # Small smoke test (single grid step, tile clamped to 8 rows), f32 path.
    batch = 8
    x = jax.random.uniform(k_x1, (batch, IN_FEATURES), jnp.float32)
    out = jax.block_until_ready(pinn_forward(x, padded_f32))
    ref = pinn_forward_ref(x, params)
    assert out.shape == (batch, OUT_FEATURES), out.shape
    assert jnp.allclose(out, ref, atol=1e-5, rtol=1e-5), (
        "Pallas output mismatch vs JAX reference (small batch, f32)")

    # Multi-tile test: non-multiple batch, forces grid > 1 and batch padding.
    batch2 = 300
    x2 = jax.random.uniform(k_x2, (batch2, IN_FEATURES), jnp.float32)
    out2 = jax.block_until_ready(pinn_forward(x2, padded_f32, batch_tile=128))
    ref2 = pinn_forward_ref(x2, params)
    assert out2.shape == (batch2, OUT_FEATURES), out2.shape
    assert jnp.allclose(out2, ref2, atol=1e-5, rtol=1e-5), (
        "Pallas output mismatch vs JAX reference (tiled batch, f32)")

    # bf16-weights path (f32 accumulation) — looser tolerance.
    out3 = jax.block_until_ready(pinn_forward(x2, padded_bf16, batch_tile=128))
    assert out3.shape == (batch2, OUT_FEATURES), out3.shape
    assert jnp.allclose(out3, ref2, atol=3e-2, rtol=3e-2), (
        "Pallas output mismatch vs JAX reference (bf16 weights)")

    print("KERNEL_OK")
</pallas_src>

<mosaic_0001>
module attributes {stable_mosaic.version = 11 : i64} {
  func.func @_pinn_mlp_kernel(%arg0: i32, %arg1: memref<8x8xf32, #tpu.memory_space<vmem>>, %arg2: memref<8x128xf32, #tpu.memory_space<vmem>>, %arg3: memref<1x128xf32, #tpu.memory_space<vmem>>, %arg4: memref<6x128x128xf32, #tpu.memory_space<vmem>>, %arg5: memref<6x1x128xf32, #tpu.memory_space<vmem>>, %arg6: memref<128x1xf32, #tpu.memory_space<vmem>>, %arg7: memref<1x1xf32, #tpu.memory_space<vmem>>, %arg8: memref<8x1xf32, #tpu.memory_space<vmem>>) attributes {dimension_semantics = [#tpu.dimension_semantics<parallel>], iteration_bounds = array<i64: 1>, scalar_prefetch = 0 : i64, scratch_operands = 0 : i64, tpu.core_type = #tpu.core_type<tc>, window_params = [{transform_indices = @transform_0, window_bounds = array<i64: 8, 8>}, {pipeline_mode = #tpu.pipeline_mode<synchronous>, transform_indices = @transform_1, window_bounds = array<i64: 8, 128>}, {pipeline_mode = #tpu.pipeline_mode<synchronous>, transform_indices = @transform_2, window_bounds = array<i64: 1, 128>}, {pipeline_mode = #tpu.pipeline_mode<synchronous>, transform_indices = @transform_3, window_bounds = array<i64: 6, 128, 128>}, {pipeline_mode = #tpu.pipeline_mode<synchronous>, transform_indices = @transform_4, window_bounds = array<i64: 6, 1, 128>}, {pipeline_mode = #tpu.pipeline_mode<synchronous>, transform_indices = @transform_5, window_bounds = array<i64: 128, 1>}, {pipeline_mode = #tpu.pipeline_mode<synchronous>, transform_indices = @transform_6, window_bounds = array<i64: 1, 1>}, {transform_indices = @transform_7, window_bounds = array<i64: 8, 1>}]} {
    %c0 = arith.constant 0 : index
    %c0_0 = arith.constant 0 : index
    %0 = vector.load %arg1[%c0, %c0_0] : memref<8x8xf32, #tpu.memory_space<vmem>>, vector<8x8xf32>
    %c0_1 = arith.constant 0 : index
    %c0_2 = arith.constant 0 : index
    %1 = vector.load %arg2[%c0_1, %c0_2] : memref<8x128xf32, #tpu.memory_space<vmem>>, vector<8x128xf32>
    %cst = arith.constant dense<0.000000e+00> : vector<8x128xf32>
    %2 = tpu.matmul %0, %1, %cst {dimension_numbers = #tpu.dot_dimension_numbers<[1], [0], [0], [1], [0, 0, 1, 1], [], []>} : vector<8x8xf32>, vector<8x128xf32>, vector<8x128xf32> -> vector<8x128xf32>
    %c0_3 = arith.constant 0 : index
    %c0_4 = arith.constant 0 : index
    %3 = vector.load %arg3[%c0_3, %c0_4] : memref<1x128xf32, #tpu.memory_space<vmem>>, vector<1x128xf32>
    %4 = vector.broadcast %3 : vector<1x128xf32> to vector<8x128xf32>
    %5 = arith.addf %2, %4 : vector<8x128xf32>
    %6 = math.tanh %5 : vector<8x128xf32>
    %c0_5 = arith.constant 0 : index
    %c0_6 = arith.constant 0 : index
    %c0_7 = arith.constant 0 : index
    %7 = vector.load %arg4[%c0_5, %c0_6, %c0_7] : memref<6x128x128xf32, #tpu.memory_space<vmem>>, vector<1x128x128xf32>
    %8 = vector.shape_cast %7 : vector<1x128x128xf32> to vector<128x128xf32>
    %cst_8 = arith.constant dense<0.000000e+00> : vector<8x128xf32>
    %9 = tpu.matmul %6, %8, %cst_8 {dimension_numbers = #tpu.dot_dimension_numbers<[1], [0], [0], [1], [0, 0, 1, 1], [], []>} : vector<8x128xf32>, vector<128x128xf32>, vector<8x128xf32> -> vector<8x128xf32>
    %c0_9 = arith.constant 0 : index
    %c0_10 = arith.constant 0 : index
    %c0_11 = arith.constant 0 : index
    %10 = vector.load %arg5[%c0_9, %c0_10, %c0_11] : memref<6x1x128xf32, #tpu.memory_space<vmem>>, vector<1x1x128xf32>
    %11 = vector.shape_cast %10 : vector<1x1x128xf32> to vector<1x128xf32>
    %12 = vector.broadcast %11 : vector<1x128xf32> to vector<8x128xf32>
    %13 = arith.addf %9, %12 : vector<8x128xf32>
    %14 = math.tanh %13 : vector<8x128xf32>
    %c1 = arith.constant 1 : index
    %c0_12 = arith.constant 0 : index
    %c0_13 = arith.constant 0 : index
    %15 = vector.load %arg4[%c1, %c0_12, %c0_13] : memref<6x128x128xf32, #tpu.memory_space<vmem>>, vector<1x128x128xf32>
    %16 = vector.shape_cast %15 : vector<1x128x128xf32> to vector<128x128xf32>
    %cst_14 = arith.constant dense<0.000000e+00> : vector<8x128xf32>
    %17 = tpu.matmul %14, %16, %cst_14 {dimension_numbers = #tpu.dot_dimension_numbers<[1], [0], [0], [1], [0, 0, 1, 1], [], []>} : vector<8x128xf32>, vector<128x128xf32>, vector<8x128xf32> -> vector<8x128xf32>
    %c1_15 = arith.constant 1 : index
    %c0_16 = arith.constant 0 : index
    %c0_17 = arith.constant 0 : index
    %18 = vector.load %arg5[%c1_15, %c0_16, %c0_17] : memref<6x1x128xf32, #tpu.memory_space<vmem>>, vector<1x1x128xf32>
    %19 = vector.shape_cast %18 : vector<1x1x128xf32> to vector<1x128xf32>
    %20 = vector.broadcast %19 : vector<1x128xf32> to vector<8x128xf32>
    %21 = arith.addf %17, %20 : vector<8x128xf32>
    %22 = math.tanh %21 : vector<8x128xf32>
    %c2 = arith.constant 2 : index
    %c0_18 = arith.constant 0 : index
    %c0_19 = arith.constant 0 : index
    %23 = vector.load %arg4[%c2, %c0_18, %c0_19] : memref<6x128x128xf32, #tpu.memory_space<vmem>>, vector<1x128x128xf32>
    %24 = vector.shape_cast %23 : vector<1x128x128xf32> to vector<128x128xf32>
    %cst_20 = arith.constant dense<0.000000e+00> : vector<8x128xf32>
    %25 = tpu.matmul %22, %24, %cst_20 {dimension_numbers = #tpu.dot_dimension_numbers<[1], [0], [0], [1], [0, 0, 1, 1], [], []>} : vector<8x128xf32>, vector<128x128xf32>, vector<8x128xf32> -> vector<8x128xf32>
    %c2_21 = arith.constant 2 : index
    %c0_22 = arith.constant 0 : index
    %c0_23 = arith.constant 0 : index
    %26 = vector.load %arg5[%c2_21, %c0_22, %c0_23] : memref<6x1x128xf32, #tpu.memory_space<vmem>>, vector<1x1x128xf32>
    %27 = vector.shape_cast %26 : vector<1x1x128xf32> to vector<1x128xf32>
    %28 = vector.broadcast %27 : vector<1x128xf32> to vector<8x128xf32>
    %29 = arith.addf %25, %28 : vector<8x128xf32>
    %30 = math.tanh %29 : vector<8x128xf32>
    %c3 = arith.constant 3 : index
    %c0_24 = arith.constant 0 : index
    %c0_25 = arith.constant 0 : index
    %31 = vector.load %arg4[%c3, %c0_24, %c0_25] : memref<6x128x128xf32, #tpu.memory_space<vmem>>, vector<1x128x128xf32>
    %32 = vector.shape_cast %31 : vector<1x128x128xf32> to vector<128x128xf32>
    %cst_26 = arith.constant dense<0.000000e+00> : vector<8x128xf32>
    %33 = tpu.matmul %30, %32, %cst_26 {dimension_numbers = #tpu.dot_dimension_numbers<[1], [0], [0], [1], [0, 0, 1, 1], [], []>} : vector<8x128xf32>, vector<128x128xf32>, vector<8x128xf32> -> vector<8x128xf32>
    %c3_27 = arith.constant 3 : index
    %c0_28 = arith.constant 0 : index
    %c0_29 = arith.constant 0 : index
    %34 = vector.load %arg5[%c3_27, %c0_28, %c0_29] : memref<6x1x128xf32, #tpu.memory_space<vmem>>, vector<1x1x128xf32>
    %35 = vector.shape_cast %34 : vector<1x1x128xf32> to vector<1x128xf32>
    %36 = vector.broadcast %35 : vector<1x128xf32> to vector<8x128xf32>
    %37 = arith.addf %33, %36 : vector<8x128xf32>
    %38 = math.tanh %37 : vector<8x128xf32>
    %c4 = arith.constant 4 : index
    %c0_30 = arith.constant 0 : index
    %c0_31 = arith.constant 0 : index
    %39 = vector.load %arg4[%c4, %c0_30, %c0_31] : memref<6x128x128xf32, #tpu.memory_space<vmem>>, vector<1x128x128xf32>
    %40 = vector.shape_cast %39 : vector<1x128x128xf32> to vector<128x128xf32>
    %cst_32 = arith.constant dense<0.000000e+00> : vector<8x128xf32>
    %41 = tpu.matmul %38, %40, %cst_32 {dimension_numbers = #tpu.dot_dimension_numbers<[1], [0], [0], [1], [0, 0, 1, 1], [], []>} : vector<8x128xf32>, vector<128x128xf32>, vector<8x128xf32> -> vector<8x128xf32>
    %c4_33 = arith.constant 4 : index
    %c0_34 = arith.constant 0 : index
    %c0_35 = arith.constant 0 : index
    %42 = vector.load %arg5[%c4_33, %c0_34, %c0_35] : memref<6x1x128xf32, #tpu.memory_space<vmem>>, vector<1x1x128xf32>
    %43 = vector.shape_cast %42 : vector<1x1x128xf32> to vector<1x128xf32>
    %44 = vector.broadcast %43 : vector<1x128xf32> to vector<8x128xf32>
    %45 = arith.addf %41, %44 : vector<8x128xf32>
    %46 = math.tanh %45 : vector<8x128xf32>
    %c5 = arith.constant 5 : index
    %c0_36 = arith.constant 0 : index
    %c0_37 = arith.constant 0 : index
    %47 = vector.load %arg4[%c5, %c0_36, %c0_37] : memref<6x128x128xf32, #tpu.memory_space<vmem>>, vector<1x128x128xf32>
    %48 = vector.shape_cast %47 : vector<1x128x128xf32> to vector<128x128xf32>
    %cst_38 = arith.constant dense<0.000000e+00> : vector<8x128xf32>
    %49 = tpu.matmul %46, %48, %cst_38 {dimension_numbers = #tpu.dot_dimension_numbers<[1], [0], [0], [1], [0, 0, 1, 1], [], []>} : vector<8x128xf32>, vector<128x128xf32>, vector<8x128xf32> -> vector<8x128xf32>
    %c5_39 = arith.constant 5 : index
    %c0_40 = arith.constant 0 : index
    %c0_41 = arith.constant 0 : index
    %50 = vector.load %arg5[%c5_39, %c0_40, %c0_41] : memref<6x1x128xf32, #tpu.memory_space<vmem>>, vector<1x1x128xf32>
    %51 = vector.shape_cast %50 : vector<1x1x128xf32> to vector<1x128xf32>
    %52 = vector.broadcast %51 : vector<1x128xf32> to vector<8x128xf32>
    %53 = arith.addf %49, %52 : vector<8x128xf32>
    %54 = math.tanh %53 : vector<8x128xf32>
    %c0_42 = arith.constant 0 : index
    %c0_43 = arith.constant 0 : index
    %55 = vector.load %arg6[%c0_42, %c0_43] : memref<128x1xf32, #tpu.memory_space<vmem>>, vector<128x1xf32>
    %cst_44 = arith.constant dense<0.000000e+00> : vector<8x1xf32>
    %56 = tpu.matmul %54, %55, %cst_44 {dimension_numbers = #tpu.dot_dimension_numbers<[1], [0], [0], [1], [0, 0, 1, 1], [], []>} : vector<8x128xf32>, vector<128x1xf32>, vector<8x1xf32> -> vector<8x1xf32>
    %c0_45 = arith.constant 0 : index
    %c0_46 = arith.constant 0 : index
    %57 = vector.load %arg7[%c0_45, %c0_46] : memref<1x1xf32, #tpu.memory_space<vmem>>, vector<1x1xf32>
    %58 = vector.broadcast %57 : vector<1x1xf32> to vector<8x1xf32>
    %59 = arith.addf %56, %58 : vector<8x1xf32>
    %c0_47 = arith.constant 0 : index
    %c0_48 = arith.constant 0 : index
    %60 = vector.load %arg8[%c0_47, %c0_48] : memref<8x1xf32, #tpu.memory_space<vmem>>, vector<8x1xf32>
    tpu.vector_store %arg8[%c0_47, %c0_48], %59 {strides = array<i32>} : memref<8x1xf32, #tpu.memory_space<vmem>>, vector<8x1xf32>,
    return
  }
  func.func @transform_0(%arg0: i32) -> (i32, i32) {
    %c0_i32 = arith.constant 0 : i32
    %c0_i32_0 = arith.constant 0 : i32
    return %arg0, %c0_i32 : i32, i32
  }
  func.func @transform_1(%arg0: i32) -> (i32, i32) {
    %c0_i32 = arith.constant 0 : i32
    %c0_i32_0 = arith.constant 0 : i32
    %c0_i32_1 = arith.constant 0 : i32
    return %c0_i32, %c0_i32_0 : i32, i32
  }
  func.func @transform_2(%arg0: i32) -> (i32, i32) {
    %c0_i32 = arith.constant 0 : i32
    %c0_i32_0 = arith.constant 0 : i32
    %c0_i32_1 = arith.constant 0 : i32
    return %c0_i32, %c0_i32_0 : i32, i32
  }
  func.func @transform_3(%arg0: i32) -> (i32, i32, i32) {
    %c0_i32 = arith.constant 0 : i32
    %c0_i32_0 = arith.constant 0 : i32
    %c0_i32_1 = arith.constant 0 : i32
    %c0_i32_2 = arith.constant 0 : i32
    return %c0_i32, %c0_i32_0, %c0_i32_1 : i32, i32, i32
  }
  func.func @transform_4(%arg0: i32) -> (i32, i32, i32) {
    %c0_i32 = arith.constant 0 : i32
    %c0_i32_0 = arith.constant 0 : i32
    %c0_i32_1 = arith.constant 0 : i32
    %c0_i32_2 = arith.constant 0 : i32
    return %c0_i32, %c0_i32_0, %c0_i32_1 : i32, i32, i32
  }
  func.func @transform_5(%arg0: i32) -> (i32, i32) {
    %c0_i32 = arith.constant 0 : i32
    %c0_i32_0 = arith.constant 0 : i32
    %c0_i32_1 = arith.constant 0 : i32
    return %c0_i32, %c0_i32_0 : i32, i32
  }
  func.func @transform_6(%arg0: i32) -> (i32, i32) {
    %c0_i32 = arith.constant 0 : i32
    %c0_i32_0 = arith.constant 0 : i32
    %c0_i32_1 = arith.constant 0 : i32
    return %c0_i32, %c0_i32_0 : i32, i32
  }
  func.func @transform_7(%arg0: i32) -> (i32, i32) {
    %c0_i32 = arith.constant 0 : i32
    %c0_i32_0 = arith.constant 0 : i32
    return %arg0, %c0_i32 : i32, i32
  }
}

</mosaic_0001>

<llo_original>
// kernel: tpu_custom_call.1
$region0: #{tpu_custom_call.1}
  #allocation0 [shape = 'u32[]', space=smem, size = 0x4, offset = 0x4, fixed_abs, tag = 'smem constant byte address 0x4 - core index']
  #allocation1 [shape = 'u32[144,128]{1,0:T(1,128)}', space=vmem, size = 0x12000, scoped, tag = 'internal scratch']
  #allocation2 [shape = 'f32[1,1]{1,0:T(1,128)S(1)}', space=vmem, size = 0x200, scoped, tag = 'scoped memory for tpu_custom_call.1']
  %s0 = inlined_call_operand.hbm [shape: f32[8,8], index: 0, kind: input, shape index: {}]
  %s1 = inlined_call_operand.hbm [shape: f32[8,128], index: 1, kind: input, shape index: {}]
  %s2 = inlined_call_operand.hbm [shape: f32[1,128], index: 2, kind: input, shape index: {}]
  %s3 = inlined_call_operand.hbm [shape: f32[6,128,128], index: 3, kind: input, shape index: {}]
  %s4 = inlined_call_operand.hbm [shape: f32[6,1,128], index: 4, kind: input, shape index: {}]
  %s5 = inlined_call_operand.hbm [shape: f32[128,1], index: 5, kind: input, shape index: {}]
  %s6 = inlined_call_operand.<no memory space> [shape: f32[1,1], index: 6, kind: input, shape index: {}]
  %s7 = inlined_call_operand.hbm [shape: f32[8,1], index: 7, kind: output, shape index: {}]
  %s8 = sld [smem:[#allocation0]]
  $region62: #{tpu_custom_call.1} parent=0
    _
  %s10 = ssub.s32 1, %s8
  %s11 = scalar_select 0, %s10, %s8
  %v12 = vstv %s6
  %13 = vst [vmem:[#allocation2] sm:$0x1] %v12
  $region1: #{tpu_custom_call.1} parent=0
    #allocation3 [shape = 'u8[4096]{0}', space=vmem, size = 0x1000, scoped, tag = 'input window, operand 0, single buffered']
    #allocation4 [shape = 's32[1]{0}', space=sflag, size = 0x4, scoped, tag = 'scoped memory for tpu_custom_call.1']
    #allocation5 [shape = 's32[1]{0}', space=sflag, size = 0x4, scoped, tag = 'scoped memory for tpu_custom_call.1']
    #allocation6 [shape = 'u8[4096]{0}', space=vmem, size = 0x1000, scoped, tag = 'input window, operand 1, single buffered']
    #allocation7 [shape = 's32[1]{0}', space=sflag, size = 0x4, scoped, tag = 'scoped memory for tpu_custom_call.1']
    #allocation8 [shape = 'u8[512]{0}', space=vmem, size = 0x400, scoped, tag = 'input window, operand 2, single buffered']
    #allocation9 [shape = 'u8[393216]{0}', space=vmem, size = 0x60000, scoped, tag = 'input window, operand 3, single buffered']
    #allocation10 [shape = 's32[1]{0}', space=sflag, size = 0x4, scoped, tag = 'scoped memory for tpu_custom_call.1']
    #allocation11 [shape = 'u8[3072]{0}', space=vmem, size = 0xc00, scoped, tag = 'input window, operand 4, single buffered']
    #allocation12 [shape = 'u8[65536]{0}', space=vmem, size = 0x10000, scoped, tag = 'input window, operand 5, single buffered']
    #allocation13 [shape = 's32[1]{0}', space=sflag, size = 0x4, scoped, tag = 'scoped memory for tpu_custom_call.1']
    #allocation14 [shape = 'u8[4096]{0}', space=vmem, size = 0x1000, scoped, tag = 'output window, operand 0, single buffered']
    %14 = vsyncpa [#allocation4], 0
    %15 = vsyncpa [#allocation7], 0
    %16 = vsyncpa [#allocation10], 0
    %17 = vsyncpa [#allocation13], 0
    %18 = vsyncpa [#allocation5], 0
    // Predicated region
    $region2: #{tpu_custom_call.1} parent=1 // pred_check
      _
    $region3: #{tpu_custom_call.1} parent=1 // pred_check_branch
      %20 = sbr.rel (0) target = $region5
    $region4: #{tpu_custom_call.1} parent=1 // pred_region
      %s22 = ssub.s32 128, 128
      %23 = vsyncadd [#allocation4], %s22
      %s25 = sshll.u32 [#allocation3], 4
      %s26 = int_to_ptr.vmem [resolvable:$true] %s25
      %28 = dma.hbm_to_vmem [thread:$0]  %s0, 128, %s26, [#allocation4]
    $region5: #{tpu_custom_call.1} parent=1 // pred_fallthru
      _
    // Predicated region
    $region6: #{tpu_custom_call.1} parent=1 // pred_check
      _
    $region7: #{tpu_custom_call.1} parent=1 // pred_check_branch
      %30 = sbr.rel (0) target = $region9
    $region8: #{tpu_custom_call.1} parent=1 // pred_region
      %s32 = ssub.s32 128, 128
      %33 = vsyncadd [#allocation7], %s32
      %s35 = sshll.u32 [#allocation6], 4
      %s36 = int_to_ptr.vmem [resolvable:$true] %s35
      %38 = dma.hbm_to_vmem [thread:$0]  %s1, 128, %s36, [#allocation7]
    $region9: #{tpu_custom_call.1} parent=1 // pred_fallthru
      _
    // Predicated region
    $region10: #{tpu_custom_call.1} parent=1 // pred_check
      _
    $region11: #{tpu_custom_call.1} parent=1 // pred_check_branch
      %40 = sbr.rel (0) target = $region13
    $region12: #{tpu_custom_call.1} parent=1 // pred_region
      %s42 = ssub.s32 16, 16
      %43 = vsyncadd [#allocation7], %s42
      %s45 = sshll.u32 [#allocation8], 4
      %s46 = int_to_ptr.vmem [resolvable:$true] %s45
      %48 = dma.hbm_to_vmem [thread:$0]  %s2, 16, %s46, [#allocation7]
    $region13: #{tpu_custom_call.1} parent=1 // pred_fallthru
      _
    // Predicated region
    $region14: #{tpu_custom_call.1} parent=1 // pred_check
      _
    $region15: #{tpu_custom_call.1} parent=1 // pred_check_branch
      %50 = sbr.rel (0) target = $region17
    $region16: #{tpu_custom_call.1} parent=1 // pred_region
      %s52 = ssub.s32 12288, 12288
      %53 = vsyncadd [#allocation10], %s52
      %s54 = sshll.u32 [#allocation9], 4
      %s55 = int_to_ptr.vmem [resolvable:$true] %s54
      %60 = dma.hbm_to_vmem [thread:$0]  %s3, 12288, %s55, [#allocation10], 128, 128, 8
    $region17: #{tpu_custom_call.1} parent=1 // pred_fallthru
      _
    // Predicated region
    $region18: #{tpu_custom_call.1} parent=1 // pred_check
      _
    $region19: #{tpu_custom_call.1} parent=1 // pred_check_branch
      %62 = sbr.rel (0) target = $region21
    $region20: #{tpu_custom_call.1} parent=1 // pred_region
      %s64 = ssub.s32 96, 96
      %65 = vsyncadd [#allocation10], %s64
      %s66 = sshll.u32 [#allocation11], 4
      %s67 = int_to_ptr.vmem [resolvable:$true] %s66
      %72 = dma.hbm_to_vmem [thread:$0]  %s4, 96, %s67, [#allocation10], 16, 16, 1
    $region21: #{tpu_custom_call.1} parent=1 // pred_fallthru
      _
    // Predicated region
    $region22: #{tpu_custom_call.1} parent=1 // pred_check
      _
    $region23: #{tpu_custom_call.1} parent=1 // pred_check_branch
      %74 = sbr.rel (0) target = $region25
    $region24: #{tpu_custom_call.1} parent=1 // pred_region
      %s76 = ssub.s32 2048, 2048
      %77 = vsyncadd [#allocation13], %s76
      %s78 = sshll.u32 [#allocation12], 4
      %s79 = int_to_ptr.vmem [resolvable:$true] %s78
      %84 = dma.hbm_to_vmem [thread:$0]  %s5, 2048, %s79, [#allocation13], 128, 128, 8
    $region25: #{tpu_custom_call.1} parent=1 // pred_fallthru
      _
    // Predicated region
    $region26: #{tpu_custom_call.1} parent=1 // pred_check
      _
    $region27: #{tpu_custom_call.1} parent=1 // pred_check_branch
      %86 = sbr.rel (0) target = $region29
    $region28: #{tpu_custom_call.1} parent=1 // pred_region
      _
    $region29: #{tpu_custom_call.1} parent=1 // pred_fallthru
      _
    // Predicated region
    $region30: #{tpu_custom_call.1} parent=1 // pred_check
      _
    $region31: #{tpu_custom_call.1} parent=1 // pred_check_branch
      %88 = sbr.rel (0) target = $region33
    $region32: #{tpu_custom_call.1} parent=1 // pred_region
      %89 = dma.done [#allocation4], 128
    $region33: #{tpu_custom_call.1} parent=1 // pred_fallthru
      _
    // Predicated region
    $region34: #{tpu_custom_call.1} parent=1 // pred_check
      _
    $region35: #{tpu_custom_call.1} parent=1 // pred_check_branch
      %91 = sbr.rel (0) target = $region37
    $region36: #{tpu_custom_call.1} parent=1 // pred_region
      %92 = dma.done [#allocation7], 128
    $region37: #{tpu_custom_call.1} parent=1 // pred_fallthru
      _
    // Predicated region
    $region38: #{tpu_custom_call.1} parent=1 // pred_check
      _
    $region39: #{tpu_custom_call.1} parent=1 // pred_check_branch
      %94 = sbr.rel (0) target = $region41
    $region40: #{tpu_custom_call.1} parent=1 // pred_region
      %95 = dma.done [#allocation7], 16
    $region41: #{tpu_custom_call.1} parent=1 // pred_fallthru
      _
    // Predicated region
    $region42: #{tpu_custom_call.1} parent=1 // pred_check
      _
    $region43: #{tpu_custom_call.1} parent=1 // pred_check_branch
      %97 = sbr.rel (0) target = $region45
    $region44: #{tpu_custom_call.1} parent=1 // pred_region
      %98 = dma.done [#allocation10], 12288
    $region45: #{tpu_custom_call.1} parent=1 // pred_fallthru
      _
    // Predicated region
    $region46: #{tpu_custom_call.1} parent=1 // pred_check
      _
    $region47: #{tpu_custom_call.1} parent=1 // pred_check_branch
      %100 = sbr.rel (0) target = $region49
    $region48: #{tpu_custom_call.1} parent=1 // pred_region
      %101 = dma.done [#allocation10], 96
    $region49: #{tpu_custom_call.1} parent=1 // pred_fallthru
      _
    // Predicated region
    $region50: #{tpu_custom_call.1} parent=1 // pred_check
      _
    $region51: #{tpu_custom_call.1} parent=1 // pred_check_branch
      %103 = sbr.rel (0) target = $region53
    $region52: #{tpu_custom_call.1} parent=1 // pred_region
      %104 = dma.done [#allocation13], 2048
    $region53: #{tpu_custom_call.1} parent=1 // pred_fallthru
      _
    %v105 = vld [vmem:[#allocation3] sm:$0xff]
    %v106 = vld [vmem:[#allocation6] sm:$0xff]
    %v107 = vld [vmem:[#allocation8] sm:$0x1]
    %v109 = vlaneseq
    %v110 = vshrl.u32 %v109, 7
    %v111 = vsub.s32 0, %v110
    %v112 = vrot.slane %v107, %v111
    %vm114 = vcmask 64512
    %v116 = vsel %vm114, %v105, 0
    %118 = vmatprep.subr.mxu0 0.0
    %119 = vmatpush1.msra.mxu0 %v106
    %120 = vmatprep.subr.mxu0 0.0
    %121 = vmatpush1.msra.mxu0 0.0
    %122 = vmatprep.subr.mxu0 0.0
    %123 = vmatpush1.msra.mxu0 0.0
    %124 = vmatprep.subr.mxu0 0.0
    %125 = vmatpush1.msra.mxu0 0.0
    %126 = vmatprep.subr.mxu0 0.0
    %127 = vmatpush1.msra.mxu0 0.0
    %128 = vmatprep.subr.mxu0 0.0
    %129 = vmatpush1.msra.mxu0 0.0
    %130 = vmatprep.subr.mxu0 0.0
    %131 = vmatpush1.msra.mxu0 0.0
    %132 = vmatprep.subr.mxu0 0.0
    %133 = vmatpush1.msra.mxu0 0.0
    %134 = vmatprep.subr.mxu0 0.0
    %135 = vmatpush1.msra.mxu0 0.0
    %136 = vmatprep.subr.mxu0 0.0
    %137 = vmatpush1.msra.mxu0 0.0
    %138 = vmatprep.subr.mxu0 0.0
    %139 = vmatpush1.msra.mxu0 0.0
    %140 = vmatprep.subr.mxu0 0.0
    %141 = vmatpush1.msra.mxu0 0.0
    %142 = vmatprep.subr.mxu0 0.0
    %143 = vmatpush1.msra.mxu0 0.0
    %144 = vmatprep.subr.mxu0 0.0
    %145 = vmatpush1.msra.mxu0 0.0
    %146 = vmatprep.subr.mxu0 0.0
    %147 = vmatpush1.msra.mxu0 0.0
    %148 = vmatprep.subr.mxu0 0.0
    %149 = vmatpush1.msra.mxu0 0.0
    %150 = vmatprep.subr.mxu0 0.0
    %151 = vmatpush1.msra.mxu0 0.0
    %152 = vmatprep.subr.mxu0 0.0
    %153 = vmatpush1.msra.mxu0 0.0
    %154 = vmatprep.subr.mxu0 0.0
    %155 = vmatpush1.msra.mxu0 0.0
    %156 = vmatprep.subr.mxu0 0.0
    %157 = vmatpush1.msra.mxu0 0.0
    %158 = vmatprep.subr.mxu0 0.0
    %159 = vmatpush1.msra.mxu0 0.0
    %160 = vmatprep.subr.mxu0 0.0
    %161 = vmatpush1.msra.mxu0 0.0
    %162 = vmatprep.subr.mxu0 0.0
    %163 = vmatpush1.msra.mxu0 0.0
    %164 = vmatprep.subr.mxu0 0.0
    %165 = vmatpush1.msra.mxu0 0.0
    %166 = vmatprep.subr.mxu0 0.0
    %167 = vmatpush1.msra.mxu0 0.0
    %168 = vmatprep.subr.mxu0 0.0
    %169 = vmatpush1.msra.mxu0 0.0
    %170 = vmatprep.subr.mxu0 0.0
    %171 = vmatpush1.msra.mxu0 0.0
    %172 = vmatprep.subr.mxu0 0.0
    %173 = vmatpush1.msra.mxu0 0.0
    %174 = vmatprep.subr.mxu0 0.0
    %175 = vmatpush1.msra.mxu0 0.0
    %176 = vmatprep.subr.mxu0 0.0
    %177 = vmatpush1.msra.mxu0 0.0
    %178 = vmatprep.subr.mxu0 0.0
    %179 = vmatpush1.msra.mxu0 0.0
    %180 = vmatprep.subr.mxu0 0.0
    %181 = vmatpush1.msra.mxu0 0.0
    %182 = vmatprep.mubr.f32.mxu0 0.0
    %183 = vmatmul.mubr.f32.gmra.mrb[0].mxu0 %v116
    %v184 = vpop.f32.mrb[0].mxu0
    %v185 = vadd.f32 %v112, %v184
    %v186 = vpop.f32.mrb[0].mxu0
    %187 = vdwg.mxu0
    %v188 = vtanh.pop %v185
    %v189 = vld [vmem:[#allocation9] sm:$0xff]
    %v190 = vld [vmem:[#allocation9 + $0x8] sm:$0xff]
    %v191 = vld [vmem:[#allocation9 + $0x10] sm:$0xff]
    %v192 = vld [vmem:[#allocation9 + $0x18] sm:$0xff]
    %v193 = vld [vmem:[#allocation9 + $0x20] sm:$0xff]
    %v194 = vld [vmem:[#allocation9 + $0x28] sm:$0xff]
    %v195 = vld [vmem:[#allocation9 + $0x30] sm:$0xff]
    %v196 = vld [vmem:[#allocation9 + $0x38] sm:$0xff]
    %v197 = vld [vmem:[#allocation9 + $0x40] sm:$0xff]
    %v198 = vld [vmem:[#allocation9 + $0x48] sm:$0xff]
    %v199 = vld [vmem:[#allocation9 + $0x50] sm:$0xff]
    %v200 = vld [vmem:[#allocation9 + $0x58] sm:$0xff]
    %v201 = vld [vmem:[#allocation9 + $0x60] sm:$0xff]
    %v202 = vld [vmem:[#allocation9 + $0x68] sm:$0xff]
    %v203 = vld [vmem:[#allocation9 + $0x70] sm:$0xff]
    %v204 = vld [vmem:[#allocation9 + $0x78] sm:$0xff]
    %v205 = vld [vmem:[#allocation11] sm:$0x1]
    %v207 = vlaneseq
    %v208 = vshrl.u32 %v207, 7
    %v209 = vsub.s32 0, %v208
    %v210 = vrot.slane %v205, %v209
    %212 = vmatprep.subr.mxu0 0.0
    %213 = vmatpush1.msra.mxu0 %v189
    %214 = vmatprep.subr.mxu0 0.0
    %215 = vmatpush1.msra.mxu0 %v190
    %216 = vmatprep.subr.mxu0 0.0
    %217 = vmatpush1.msra.mxu0 %v191
    %218 = vmatprep.subr.mxu0 0.0
    %219 = vmatpush1.msra.mxu0 %v192
    %220 = vmatprep.subr.mxu0 0.0
    %221 = vmatpush1.msra.mxu0 %v193
    %222 = vmatprep.subr.mxu0 0.0
    %223 = vmatpush1.msra.mxu0 %v194
    %224 = vmatprep.subr.mxu0 0.0
    %225 = vmatpush1.msra.mxu0 %v195
    %226 = vmatprep.subr.mxu0 0.0
    %227 = vmatpush1.msra.mxu0 %v196
    %228 = vmatprep.subr.mxu0 0.0
    %229 = vmatpush1.msra.mxu0 %v197
    %230 = vmatprep.subr.mxu0 0.0
    %231 = vmatpush1.msra.mxu0 %v198
    %232 = vmatprep.subr.mxu0 0.0
    %233 = vmatpush1.msra.mxu0 %v199
    %234 = vmatprep.subr.mxu0 0.0
    %235 = vmatpush1.msra.mxu0 %v200
    %236 = vmatprep.subr.mxu0 0.0
    %237 = vmatpush1.msra.mxu0 %v201
    %238 = vmatprep.subr.mxu0 0.0
    %239 = vmatpush1.msra.mxu0 %v202
    %240 = vmatprep.subr.mxu0 0.0
    %241 = vmatpush1.msra.mxu0 %v203
    %242 = vmatprep.subr.mxu0 0.0
    %243 = vmatpush1.msra.mxu0 %v204
    %244 = vmatprep.subr.mxu0 0.0
    %245 = vmatpush1.msra.mxu0 0.0
    %246 = vmatprep.subr.mxu0 0.0
    %247 = vmatpush1.msra.mxu0 0.0
    %248 = vmatprep.subr.mxu0 0.0
    %249 = vmatpush1.msra.mxu0 0.0
    %250 = vmatprep.subr.mxu0 0.0
    %251 = vmatpush1.msra.mxu0 0.0
    %252 = vmatprep.subr.mxu0 0.0
    %253 = vmatpush1.msra.mxu0 0.0
    %254 = vmatprep.subr.mxu0 0.0
    %255 = vmatpush1.msra.mxu0 0.0
    %256 = vmatprep.subr.mxu0 0.0
    %257 = vmatpush1.msra.mxu0 0.0
    %258 = vmatprep.subr.mxu0 0.0
    %259 = vmatpush1.msra.mxu0 0.0
    %260 = vmatprep.subr.mxu0 0.0
    %261 = vmatpush1.msra.mxu0 0.0
    %262 = vmatprep.subr.mxu0 0.0
    %263 = vmatpush1.msra.mxu0 0.0
    %264 = vmatprep.subr.mxu0 0.0
    %265 = vmatpush1.msra.mxu0 0.0
    %266 = vmatprep.subr.mxu0 0.0
    %267 = vmatpush1.msra.mxu0 0.0
    %268 = vmatprep.subr.mxu0 0.0
    %269 = vmatpush1.msra.mxu0 0.0
    %270 = vmatprep.subr.mxu0 0.0
    %271 = vmatpush1.msra.mxu0 0.0
    %272 = vmatprep.subr.mxu0 0.0
    %273 = vmatpush1.msra.mxu0 0.0
    %274 = vmatprep.subr.mxu0 0.0
    %275 = vmatpush1.msra.mxu0 0.0
    %276 = vmatprep.mubr.f32.mxu0 0.0
    %277 = vmatmul.mubr.f32.gmra.mrb[0].mxu0 %v188
    %v278 = vpop.f32.mrb[0].mxu0
    %v279 = vadd.f32 %v210, %v278
    %v280 = vpop.f32.mrb[0].mxu0
    %281 = vdwg.mxu0
    %v282 = vtanh.pop %v279
    %s283 = scalar_lea.vmem [#allocation9], 128
    %v284 = vld [vmem:[%s283] sm:$0xff]
    %v285 = vld [vmem:[%s283 + $0x8] sm:$0xff]
    %v286 = vld [vmem:[%s283 + $0x10] sm:$0xff]
    %v287 = vld [vmem:[%s283 + $0x18] sm:$0xff]
    %v288 = vld [vmem:[%s283 + $0x20] sm:$0xff]
    %v289 = vld [vmem:[%s283 + $0x28] sm:$0xff]
    %v290 = vld [vmem:[%s283 + $0x30] sm:$0xff]
    %v291 = vld [vmem:[%s283 + $0x38] sm:$0xff]
    %v292 = vld [vmem:[%s283 + $0x40] sm:$0xff]
    %v293 = vld [vmem:[%s283 + $0x48] sm:$0xff]
    %v294 = vld [vmem:[%s283 + $0x50] sm:$0xff]
    %v295 = vld [vmem:[%s283 + $0x58] sm:$0xff]
    %v296 = vld [vmem:[%s283 + $0x60] sm:$0xff]
    %v297 = vld [vmem:[%s283 + $0x68] sm:$0xff]
    %v298 = vld [vmem:[%s283 + $0x70] sm:$0xff]
    %v299 = vld [vmem:[%s283 + $0x78] sm:$0xff]
    %s300 = scalar_lea.vmem [#allocation11], 1
    %v301 = vld [vmem:[%s300] sm:$0x1]
    %v303 = vlaneseq
    %v304 = vshrl.u32 %v303, 7
    %v305 = vsub.s32 0, %v304
    %v306 = vrot.slane %v301, %v305
    %308 = vmatprep.subr.mxu0 0.0
    %309 = vmatpush1.msra.mxu0 %v284
    %310 = vmatprep.subr.mxu0 0.0
    %311 = vmatpush1.msra.mxu0 %v285
    %312 = vmatprep.subr.mxu0 0.0
    %313 = vmatpush1.msra.mxu0 %v286
    %314 = vmatprep.subr.mxu0 0.0
    %315 = vmatpush1.msra.mxu0 %v287
    %316 = vmatprep.subr.mxu0 0.0
    %317 = vmatpush1.msra.mxu0 %v288
    %318 = vmatprep.subr.mxu0 0.0
    %319 = vmatpush1.msra.mxu0 %v289
    %320 = vmatprep.subr.mxu0 0.0
    %321 = vmatpush1.msra.mxu0 %v290
    %322 = vmatprep.subr.mxu0 0.0
    %323 = vmatpush1.msra.mxu0 %v291
    %324 = vmatprep.subr.mxu0 0.0
    %325 = vmatpush1.msra.mxu0 %v292
    %326 = vmatprep.subr.mxu0 0.0
    %327 = vmatpush1.msra.mxu0 %v293
    %328 = vmatprep.subr.mxu0 0.0
    %329 = vmatpush1.msra.mxu0 %v294
    %330 = vmatprep.subr.mxu0 0.0
    %331 = vmatpush1.msra.mxu0 %v295
    %332 = vmatprep.subr.mxu0 0.0
    %333 = vmatpush1.msra.mxu0 %v296
    %334 = vmatprep.subr.mxu0 0.0
    %335 = vmatpush1.msra.mxu0 %v297
    %336 = vmatprep.subr.mxu0 0.0
    %337 = vmatpush1.msra.mxu0 %v298
    %338 = vmatprep.subr.mxu0 0.0
    %339 = vmatpush1.msra.mxu0 %v299
    %340 = vmatprep.subr.mxu0 0.0
    %341 = vmatpush1.msra.mxu0 0.0
    %342 = vmatprep.subr.mxu0 0.0
    %343 = vmatpush1.msra.mxu0 0.0
    %344 = vmatprep.subr.mxu0 0.0
    %345 = vmatpush1.msra.mxu0 0.0
    %346 = vmatprep.subr.mxu0 0.0
    %347 = vmatpush1.msra.mxu0 0.0
    %348 = vmatprep.subr.mxu0 0.0
    %349 = vmatpush1.msra.mxu0 0.0
    %350 = vmatprep.subr.mxu0 0.0
    %351 = vmatpush1.msra.mxu0 0.0
    %352 = vmatprep.subr.mxu0 0.0
    %353 = vmatpush1.msra.mxu0 0.0
    %354 = vmatprep.subr.mxu0 0.0
    %355 = vmatpush1.msra.mxu0 0.0
    %356 = vmatprep.subr.mxu0 0.0
    %357 = vmatpush1.msra.mxu0 0.0
    %358 = vmatprep.subr.mxu0 0.0
    %359 = vmatpush1.msra.mxu0 0.0
    %360 = vmatprep.subr.mxu0 0.0
    %361 = vmatpush1.msra.mxu0 0.0
    %362 = vmatprep.subr.mxu0 0.0
    %363 = vmatpush1.msra.mxu0 0.0
    %364 = vmatprep.subr.mxu0 0.0
    %365 = vmatpush1.msra.mxu0 0.0
    %366 = vmatprep.subr.mxu0 0.0
    %367 = vmatpush1.msra.mxu0 0.0
    %368 = vmatprep.subr.mxu0 0.0
    %369 = vmatpush1.msra.mxu0 0.0
    %370 = vmatprep.subr.mxu0 0.0
    %371 = vmatpush1.msra.mxu0 0.0
    %372 = vmatprep.mubr.f32.mxu0 0.0
    %373 = vmatmul.mubr.f32.gmra.mrb[0].mxu0 %v282
    %v374 = vpop.f32.mrb[0].mxu0
    %v375 = vadd.f32 %v306, %v374
    %v376 = vpop.f32.mrb[0].mxu0
    %377 = vdwg.mxu0
    %v378 = vtanh.pop %v375
    %s379 = scalar_lea.vmem [#allocation9], 256
    %v380 = vld [vmem:[%s379] sm:$0xff]
    %v381 = vld [vmem:[%s379 + $0x8] sm:$0xff]
    %v382 = vld [vmem:[%s379 + $0x10] sm:$0xff]
    %v383 = vld [vmem:[%s379 + $0x18] sm:$0xff]
    %v384 = vld [vmem:[%s379 + $0x20] sm:$0xff]
    %v385 = vld [vmem:[%s379 + $0x28] sm:$0xff]
    %v386 = vld [vmem:[%s379 + $0x30] sm:$0xff]
    %v387 = vld [vmem:[%s379 + $0x38] sm:$0xff]
    %v388 = vld [vmem:[%s379 + $0x40] sm:$0xff]
    %v389 = vld [vmem:[%s379 + $0x48] sm:$0xff]
    %v390 = vld [vmem:[%s379 + $0x50] sm:$0xff]
    %v391 = vld [vmem:[%s379 + $0x58] sm:$0xff]
    %v392 = vld [vmem:[%s379 + $0x60] sm:$0xff]
    %v393 = vld [vmem:[%s379 + $0x68] sm:$0xff]
    %v394 = vld [vmem:[%s379 + $0x70] sm:$0xff]
    %v395 = vld [vmem:[%s379 + $0x78] sm:$0xff]
    %s396 = scalar_lea.vmem [#allocation11], 2
    %v397 = vld [vmem:[%s396] sm:$0x1]
    %v399 = vlaneseq
    %v400 = vshrl.u32 %v399, 7
    %v401 = vsub.s32 0, %v400
    %v402 = vrot.slane %v397, %v401
    %404 = vmatprep.subr.mxu0 0.0
    %405 = vmatpush1.msra.mxu0 %v380
    %406 = vmatprep.subr.mxu0 0.0
    %407 = vmatpush1.msra.mxu0 %v381
    %408 = vmatprep.subr.mxu0 0.0
    %409 = vmatpush1.msra.mxu0 %v382
    %410 = vmatprep.subr.mxu0 0.0
    %411 = vmatpush1.msra.mxu0 %v383
    %412 = vmatprep.subr.mxu0 0.0
    %413 = vmatpush1.msra.mxu0 %v384
    %414 = vmatprep.subr.mxu0 0.0
    %415 = vmatpush1.msra.mxu0 %v385
    %416 = vmatprep.subr.mxu0 0.0
    %417 = vmatpush1.msra.mxu0 %v386
    %418 = vmatprep.subr.mxu0 0.0
    %419 = vmatpush1.msra.mxu0 %v387
    %420 = vmatprep.subr.mxu0 0.0
    %421 = vmatpush1.msra.mxu0 %v388
    %422 = vmatprep.subr.mxu0 0.0
    %423 = vmatpush1.msra.mxu0 %v389
    %424 = vmatprep.subr.mxu0 0.0
    %425 = vmatpush1.msra.mxu0 %v390
    %426 = vmatprep.subr.mxu0 0.0
    %427 = vmatpush1.msra.mxu0 %v391
    %428 = vmatprep.subr.mxu0 0.0
    %429 = vmatpush1.msra.mxu0 %v392
    %430 = vmatprep.subr.mxu0 0.0
    %431 = vmatpush1.msra.mxu0 %v393
    %432 = vmatprep.subr.mxu0 0.0
    %433 = vmatpush1.msra.mxu0 %v394
    %434 = vmatprep.subr.mxu0 0.0
    %435 = vmatpush1.msra.mxu0 %v395
    %436 = vmatprep.subr.mxu0 0.0
    %437 = vmatpush1.msra.mxu0 0.0
    %438 = vmatprep.subr.mxu0 0.0
    %439 = vmatpush1.msra.mxu0 0.0
    %440 = vmatprep.subr.mxu0 0.0
    %441 = vmatpush1.msra.mxu0 0.0
    %442 = vmatprep.subr.mxu0 0.0
    %443 = vmatpush1.msra.mxu0 0.0
    %444 = vmatprep.subr.mxu0 0.0
    %445 = vmatpush1.msra.mxu0 0.0
    %446 = vmatprep.subr.mxu0 0.0
    %447 = vmatpush1.msra.mxu0 0.0
    %448 = vmatprep.subr.mxu0 0.0
    %449 = vmatpush1.msra.mxu0 0.0
    %450 = vmatprep.subr.mxu0 0.0
    %451 = vmatpush1.msra.mxu0 0.0
    %452 = vmatprep.subr.mxu0 0.0
    %453 = vmatpush1.msra.mxu0 0.0
    %454 = vmatprep.subr.mxu0 0.0
    %455 = vmatpush1.msra.mxu0 0.0
    %456 = vmatprep.subr.mxu0 0.0
    %457 = vmatpush1.msra.mxu0 0.0
    %458 = vmatprep.subr.mxu0 0.0
    %459 = vmatpush1.msra.mxu0 0.0
    %460 = vmatprep.subr.mxu0 0.0
    %461 = vmatpush1.msra.mxu0 0.0
    %462 = vmatprep.subr.mxu0 0.0
    %463 = vmatpush1.msra.mxu0 0.0
    %464 = vmatprep.subr.mxu0 0.0
    %465 = vmatpush1.msra.mxu0 0.0
    %466 = vmatprep.subr.mxu0 0.0
    %467 = vmatpush1.msra.mxu0 0.0
    %468 = vmatprep.mubr.f32.mxu0 0.0
    %469 = vmatmul.mubr.f32.gmra.mrb[0].mxu0 %v378
    %v470 = vpop.f32.mrb[0].mxu0
    %v471 = vadd.f32 %v402, %v470
    %v472 = vpop.f32.mrb[0].mxu0
    %473 = vdwg.mxu0
    %v474 = vtanh.pop %v471
    %s475 = scalar_lea.vmem [#allocation9], 384
    %v476 = vld [vmem:[%s475] sm:$0xff]
    %v477 = vld [vmem:[%s475 + $0x8] sm:$0xff]
    %v478 = vld [vmem:[%s475 + $0x10] sm:$0xff]
    %v479 = vld [vmem:[%s475 + $0x18] sm:$0xff]
    %v480 = vld [vmem:[%s475 + $0x20] sm:$0xff]
    %v481 = vld [vmem:[%s475 + $0x28] sm:$0xff]
    %v482 = vld [vmem:[%s475 + $0x30] sm:$0xff]
    %v483 = vld [vmem:[%s475 + $0x38] sm:$0xff]
    %v484 = vld [vmem:[%s475 + $0x40] sm:$0xff]
    %v485 = vld [vmem:[%s475 + $0x48] sm:$0xff]
    %v486 = vld [vmem:[%s475 + $0x50] sm:$0xff]
    %v487 = vld [vmem:[%s475 + $0x58] sm:$0xff]
    %v488 = vld [vmem:[%s475 + $0x60] sm:$0xff]
    %v489 = vld [vmem:[%s475 + $0x68] sm:$0xff]
    %v490 = vld [vmem:[%s475 + $0x70] sm:$0xff]
    %v491 = vld [vmem:[%s475 + $0x78] sm:$0xff]
    %s492 = scalar_lea.vmem [#allocation11], 3
    %v493 = vld [vmem:[%s492] sm:$0x1]
    %v495 = vlaneseq
    %v496 = vshrl.u32 %v495, 7
    %v497 = vsub.s32 0, %v496
    %v498 = vrot.slane %v493, %v497
    %500 = vmatprep.subr.mxu0 0.0
    %501 = vmatpush1.msra.mxu0 %v476
    %502 = vmatprep.subr.mxu0 0.0
    %503 = vmatpush1.msra.mxu0 %v477
    %504 = vmatprep.subr.mxu0 0.0
    %505 = vmatpush1.msra.mxu0 %v478
    %506 = vmatprep.subr.mxu0 0.0
    %507 = vmatpush1.msra.mxu0 %v479
    %508 = vmatprep.subr.mxu0 0.0
    %509 = vmatpush1.msra.mxu0 %v480
    %510 = vmatprep.subr.mxu0 0.0
    %511 = vmatpush1.msra.mxu0 %v481
    %512 = vmatprep.subr.mxu0 0.0
    %513 = vmatpush1.msra.mxu0 %v482
    %514 = vmatprep.subr.mxu0 0.0
    %515 = vmatpush1.msra.mxu0 %v483
    %516 = vmatprep.subr.mxu0 0.0
    %517 = vmatpush1.msra.mxu0 %v484
    %518 = vmatprep.subr.mxu0 0.0
    %519 = vmatpush1.msra.mxu0 %v485
    %520 = vmatprep.subr.mxu0 0.0
    %521 = vmatpush1.msra.mxu0 %v486
    %522 = vmatprep.subr.mxu0 0.0
    %523 = vmatpush1.msra.mxu0 %v487
    %524 = vmatprep.subr.mxu0 0.0
    %525 = vmatpush1.msra.mxu0 %v488
    %526 = vmatprep.subr.mxu0 0.0
    %527 = vmatpush1.msra.mxu0 %v489
    %528 = vmatprep.subr.mxu0 0.0
    %529 = vmatpush1.msra.mxu0 %v490
    %530 = vmatprep.subr.mxu0 0.0
    %531 = vmatpush1.msra.mxu0 %v491
    %532 = vmatprep.subr.mxu0 0.0
    %533 = vmatpush1.msra.mxu0 0.0
    %534 = vmatprep.subr.mxu0 0.0
    %535 = vmatpush1.msra.mxu0 0.0
    %536 = vmatprep.subr.mxu0 0.0
    %537 = vmatpush1.msra.mxu0 0.0
    %538 = vmatprep.subr.mxu0 0.0
    %539 = vmatpush1.msra.mxu0 0.0
    %540 = vmatprep.subr.mxu0 0.0
    %541 = vmatpush1.msra.mxu0 0.0
    %542 = vmatprep.subr.mxu0 0.0
    %543 = vmatpush1.msra.mxu0 0.0
    %544 = vmatprep.subr.mxu0 0.0
    %545 = vmatpush1.msra.mxu0 0.0
    %546 = vmatprep.subr.mxu0 0.0
    %547 = vmatpush1.msra.mxu0 0.0
    %548 = vmatprep.subr.mxu0 0.0
    %549 = vmatpush1.msra.mxu0 0.0
    %550 = vmatprep.subr.mxu0 0.0
    %551 = vmatpush1.msra.mxu0 0.0
    %552 = vmatprep.subr.mxu0 0.0
    %553 = vmatpush1.msra.mxu0 0.0
    %554 = vmatprep.subr.mxu0 0.0
    %555 = vmatpush1.msra.mxu0 0.0
    %556 = vmatprep.subr.mxu0 0.0
    %557 = vmatpush1.msra.mxu0 0.0
    %558 = vmatprep.subr.mxu0 0.0
    %559 = vmatpush1.msra.mxu0 0.0
    %560 = vmatprep.subr.mxu0 0.0
    %561 = vmatpush1.msra.mxu0 0.0
    %562 = vmatprep.subr.mxu0 0.0
    %563 = vmatpush1.msra.mxu0 0.0
    %564 = vmatprep.mubr.f32.mxu0 0.0
    %565 = vmatmul.mubr.f32.gmra.mrb[0].mxu0 %v474
    %v566 = vpop.f32.mrb[0].mxu0
    %v567 = vadd.f32 %v498, %v566
    %v568 = vpop.f32.mrb[0].mxu0
    %569 = vdwg.mxu0
    %v570 = vtanh.pop %v567
    %s571 = scalar_lea.vmem [#allocation9], 512
    %v572 = vld [vmem:[%s571] sm:$0xff]
    %v573 = vld [vmem:[%s571 + $0x8] sm:$0xff]
    %v574 = vld [vmem:[%s571 + $0x10] sm:$0xff]
    %v575 = vld [vmem:[%s571 + $0x18] sm:$0xff]
    %v576 = vld [vmem:[%s571 + $0x20] sm:$0xff]
    %v577 = vld [vmem:[%s571 + $0x28] sm:$0xff]
    %v578 = vld [vmem:[%s571 + $0x30] sm:$0xff]
    %v579 = vld [vmem:[%s571 + $0x38] sm:$0xff]
    %v580 = vld [vmem:[%s571 + $0x40] sm:$0xff]
    %v581 = vld [vmem:[%s571 + $0x48] sm:$0xff]
    %v582 = vld [vmem:[%s571 + $0x50] sm:$0xff]
    %v583 = vld [vmem:[%s571 + $0x58] sm:$0xff]
    %v584 = vld [vmem:[%s571 + $0x60] sm:$0xff]
    %v585 = vld [vmem:[%s571 + $0x68] sm:$0xff]
    %v586 = vld [vmem:[%s571 + $0x70] sm:$0xff]
    %v587 = vld [vmem:[%s571 + $0x78] sm:$0xff]
    %s588 = scalar_lea.vmem [#allocation11], 4
    %v589 = vld [vmem:[%s588] sm:$0x1]
    %v591 = vlaneseq
    %v592 = vshrl.u32 %v591, 7
    %v593 = vsub.s32 0, %v592
    %v594 = vrot.slane %v589, %v593
    %596 = vmatprep.subr.mxu0 0.0
    %597 = vmatpush1.msra.mxu0 %v572
    %598 = vmatprep.subr.mxu0 0.0
    %599 = vmatpush1.msra.mxu0 %v573
    %600 = vmatprep.subr.mxu0 0.0
    %601 = vmatpush1.msra.mxu0 %v574
    %602 = vmatprep.subr.mxu0 0.0
    %603 = vmatpush1.msra.mxu0 %v575
    %604 = vmatprep.subr.mxu0 0.0
    %605 = vmatpush1.msra.mxu0 %v576
    %606 = vmatprep.subr.mxu0 0.0
    %607 = vmatpush1.msra.mxu0 %v577
    %608 = vmatprep.subr.mxu0 0.0
    %609 = vmatpush1.msra.mxu0 %v578
    %610 = vmatprep.subr.mxu0 0.0
    %611 = vmatpush1.msra.mxu0 %v579
    %612 = vmatprep.subr.mxu0 0.0
    %613 = vmatpush1.msra.mxu0 %v580
    %614 = vmatprep.subr.mxu0 0.0
    %615 = vmatpush1.msra.mxu0 %v581
    %616 = vmatprep.subr.mxu0 0.0
    %617 = vmatpush1.msra.mxu0 %v582
    %618 = vmatprep.subr.mxu0 0.0
    %619 = vmatpush1.msra.mxu0 %v583
    %620 = vmatprep.subr.mxu0 0.0
    %621 = vmatpush1.msra.mxu0 %v584
    %622 = vmatprep.subr.mxu0 0.0
    %623 = vmatpush1.msra.mxu0 %v585
    %624 = vmatprep.subr.mxu0 0.0
    %625 = vmatpush1.msra.mxu0 %v586
    %626 = vmatprep.subr.mxu0 0.0
    %627 = vmatpush1.msra.mxu0 %v587
    %628 = vmatprep.subr.mxu0 0.0
    %629 = vmatpush1.msra.mxu0 0.0
    %630 = vmatprep.subr.mxu0 0.0
    %631 = vmatpush1.msra.mxu0 0.0
    %632 = vmatprep.subr.mxu0 0.0
    %633 = vmatpush1.msra.mxu0 0.0
    %634 = vmatprep.subr.mxu0 0.0
    %635 = vmatpush1.msra.mxu0 0.0
    %636 = vmatprep.subr.mxu0 0.0
    %637 = vmatpush1.msra.mxu0 0.0
    %638 = vmatprep.subr.mxu0 0.0
    %639 = vmatpush1.msra.mxu0 0.0
    %640 = vmatprep.subr.mxu0 0.0
    %641 = vmatpush1.msra.mxu0 0.0
    %642 = vmatprep.subr.mxu0 0.0
    %643 = vmatpush1.msra.mxu0 0.0
    %644 = vmatprep.subr.mxu0 0.0
    %645 = vmatpush1.msra.mxu0 0.0
    %646 = vmatprep.subr.mxu0 0.0
    %647 = vmatpush1.msra.mxu0 0.0
    %648 = vmatprep.subr.mxu0 0.0
    %649 = vmatpush1.msra.mxu0 0.0
    %650 = vmatprep.subr.mxu0 0.0
    %651 = vmatpush1.msra.mxu0 0.0
    %652 = vmatprep.subr.mxu0 0.0
    %653 = vmatpush1.msra.mxu0 0.0
    %654 = vmatprep.subr.mxu0 0.0
    %655 = vmatpush1.msra.mxu0 0.0
    %656 = vmatprep.subr.mxu0 0.0
    %657 = vmatpush1.msra.mxu0 0.0
    %658 = vmatprep.subr.mxu0 0.0
    %659 = vmatpush1.msra.mxu0 0.0
    %660 = vmatprep.mubr.f32.mxu0 0.0
    %661 = vmatmul.mubr.f32.gmra.mrb[0].mxu0 %v570
    %v662 = vpop.f32.mrb[0].mxu0
    %v663 = vadd.f32 %v594, %v662
    %v664 = vpop.f32.mrb[0].mxu0
    %665 = vdwg.mxu0
    %v666 = vtanh.pop %v663
    %s667 = scalar_lea.vmem [#allocation9], 640
    %v668 = vld [vmem:[%s667] sm:$0xff]
    %v669 = vld [vmem:[%s667 + $0x8] sm:$0xff]
    %v670 = vld [vmem:[%s667 + $0x10] sm:$0xff]
    %v671 = vld [vmem:[%s667 + $0x18] sm:$0xff]
    %v672 = vld [vmem:[%s667 + $0x20] sm:$0xff]
    %v673 = vld [vmem:[%s667 + $0x28] sm:$0xff]
    %v674 = vld [vmem:[%s667 + $0x30] sm:$0xff]
    %v675 = vld [vmem:[%s667 + $0x38] sm:$0xff]
    %v676 = vld [vmem:[%s667 + $0x40] sm:$0xff]
    %v677 = vld [vmem:[%s667 + $0x48] sm:$0xff]
    %v678 = vld [vmem:[%s667 + $0x50] sm:$0xff]
    %v679 = vld [vmem:[%s667 + $0x58] sm:$0xff]
    %v680 = vld [vmem:[%s667 + $0x60] sm:$0xff]
    %v681 = vld [vmem:[%s667 + $0x68] sm:$0xff]
    %v682 = vld [vmem:[%s667 + $0x70] sm:$0xff]
    %v683 = vld [vmem:[%s667 + $0x78] sm:$0xff]
    %s684 = scalar_lea.vmem [#allocation11], 5
    %v685 = vld [vmem:[%s684] sm:$0x1]
    %v687 = vlaneseq
    %v688 = vshrl.u32 %v687, 7
    %v689 = vsub.s32 0, %v688
    %v690 = vrot.slane %v685, %v689
    %692 = vmatprep.subr.mxu0 0.0
    %693 = vmatpush1.msra.mxu0 %v668
    %694 = vmatprep.subr.mxu0 0.0
    %695 = vmatpush1.msra.mxu0 %v669
    %696 = vmatprep.subr.mxu0 0.0
    %697 = vmatpush1.msra.mxu0 %v670
    %698 = vmatprep.subr.mxu0 0.0
    %699 = vmatpush1.msra.mxu0 %v671
    %700 = vmatprep.subr.mxu0 0.0
    %701 = vmatpush1.msra.mxu0 %v672
    %702 = vmatprep.subr.mxu0 0.0
    %703 = vmatpush1.msra.mxu0 %v673
    %704 = vmatprep.subr.mxu0 0.0
    %705 = vmatpush1.msra.mxu0 %v674
    %706 = vmatprep.subr.mxu0 0.0
    %707 = vmatpush1.msra.mxu0 %v675
    %708 = vmatprep.subr.mxu0 0.0
    %709 = vmatpush1.msra.mxu0 %v676
    %710 = vmatprep.subr.mxu0 0.0
    %711 = vmatpush1.msra.mxu0 %v677
    %712 = vmatprep.subr.mxu0 0.0
    %713 = vmatpush1.msra.mxu0 %v678
    %714 = vmatprep.subr.mxu0 0.0
    %715 = vmatpush1.msra.mxu0 %v679
    %716 = vmatprep.subr.mxu0 0.0
    %717 = vmatpush1.msra.mxu0 %v680
    %718 = vmatprep.subr.mxu0 0.0
    %719 = vmatpush1.msra.mxu0 %v681
    %720 = vmatprep.subr.mxu0 0.0
    %721 = vmatpush1.msra.mxu0 %v682
    %722 = vmatprep.subr.mxu0 0.0
    %723 = vmatpush1.msra.mxu0 %v683
    %724 = vmatprep.subr.mxu0 0.0
    %725 = vmatpush1.msra.mxu0 0.0
    %726 = vmatprep.subr.mxu0 0.0
    %727 = vmatpush1.msra.mxu0 0.0
    %728 = vmatprep.subr.mxu0 0.0
    %729 = vmatpush1.msra.mxu0 0.0
    %730 = vmatprep.subr.mxu0 0.0
    %731 = vmatpush1.msra.mxu0 0.0
    %732 = vmatprep.subr.mxu0 0.0
    %733 = vmatpush1.msra.mxu0 0.0
    %734 = vmatprep.subr.mxu0 0.0
    %735 = vmatpush1.msra.mxu0 0.0
    %736 = vmatprep.subr.mxu0 0.0
    %737 = vmatpush1.msra.mxu0 0.0
    %738 = vmatprep.subr.mxu0 0.0
    %739 = vmatpush1.msra.mxu0 0.0
    %740 = vmatprep.subr.mxu0 0.0
    %741 = vmatpush1.msra.mxu0 0.0
    %742 = vmatprep.subr.mxu0 0.0
    %743 = vmatpush1.msra.mxu0 0.0
    %744 = vmatprep.subr.mxu0 0.0
    %745 = vmatpush1.msra.mxu0 0.0
    %746 = vmatprep.subr.mxu0 0.0
    %747 = vmatpush1.msra.mxu0 0.0
    %748 = vmatprep.subr.mxu0 0.0
    %749 = vmatpush1.msra.mxu0 0.0
    %750 = vmatprep.subr.mxu0 0.0
    %751 = vmatpush1.msra.mxu0 0.0
    %752 = vmatprep.subr.mxu0 0.0
    %753 = vmatpush1.msra.mxu0 0.0
    %754 = vmatprep.subr.mxu0 0.0
    %755 = vmatpush1.msra.mxu0 0.0
    %756 = vmatprep.mubr.f32.mxu0 0.0
    %757 = vmatmul.mubr.f32.gmra.mrb[0].mxu0 %v666
    %v758 = vpop.f32.mrb[0].mxu0
    %v759 = vadd.f32 %v690, %v758
    %v760 = vpop.f32.mrb[0].mxu0
    %761 = vdwg.mxu0
    %v762 = vtanh.pop %v759
    %v763 = vld [vmem:[#allocation12] sm:$0xff]
    %v764 = vld [vmem:[#allocation12 + $0x8] sm:$0xff]
    %v765 = vld [vmem:[#allocation12 + $0x10] sm:$0xff]
    %v766 = vld [vmem:[#allocation12 + $0x18] sm:$0xff]
    %v767 = vld [vmem:[#allocation12 + $0x20] sm:$0xff]
    %v768 = vld [vmem:[#allocation12 + $0x28] sm:$0xff]
    %v769 = vld [vmem:[#allocation12 + $0x30] sm:$0xff]
    %v770 = vld [vmem:[#allocation12 + $0x38] sm:$0xff]
    %v771 = vld [vmem:[#allocation12 + $0x40] sm:$0xff]
    %v772 = vld [vmem:[#allocation12 + $0x48] sm:$0xff]
    %v773 = vld [vmem:[#allocation12 + $0x50] sm:$0xff]
    %v774 = vld [vmem:[#allocation12 + $0x58] sm:$0xff]
    %v775 = vld [vmem:[#allocation12 + $0x60] sm:$0xff]
    %v776 = vld [vmem:[#allocation12 + $0x68] sm:$0xff]
    %v777 = vld [vmem:[#allocation12 + $0x70] sm:$0xff]
    %v778 = vld [vmem:[#allocation12 + $0x78] sm:$0xff]
    %v779 = vld [vmem:[#allocation2] sm:$0x1]
    %v781 = vlaneseq
    %v782 = vshrl.u32 %v781, 7
    %v783 = vsub.s32 0, %v782
    %v784 = vrot.slane %v779, %v783
    %786 = vmatprep.subr.mxu0 0.0
    %787 = vmatpush1.msra.mxu0 %v763
    %788 = vmatprep.subr.mxu0 0.0
    %789 = vmatpush1.msra.mxu0 %v764
    %790 = vmatprep.subr.mxu0 0.0
    %791 = vmatpush1.msra.mxu0 %v765
    %792 = vmatprep.subr.mxu0 0.0
    %793 = vmatpush1.msra.mxu0 %v766
    %794 = vmatprep.subr.mxu0 0.0
    %795 = vmatpush1.msra.mxu0 %v767
    %796 = vmatprep.subr.mxu0 0.0
    %797 = vmatpush1.msra.mxu0 %v768
    %798 = vmatprep.subr.mxu0 0.0
    %799 = vmatpush1.msra.mxu0 %v769
    %800 = vmatprep.subr.mxu0 0.0
    %801 = vmatpush1.msra.mxu0 %v770
    %802 = vmatprep.subr.mxu0 0.0
    %803 = vmatpush1.msra.mxu0 %v771
    %804 = vmatprep.subr.mxu0 0.0
    %805 = vmatpush1.msra.mxu0 %v772
    %806 = vmatprep.subr.mxu0 0.0
    %807 = vmatpush1.msra.mxu0 %v773
    %808 = vmatprep.subr.mxu0 0.0
    %809 = vmatpush1.msra.mxu0 %v774
    %810 = vmatprep.subr.mxu0 0.0
    %811 = vmatpush1.msra.mxu0 %v775
    %812 = vmatprep.subr.mxu0 0.0
    %813 = vmatpush1.msra.mxu0 %v776
    %814 = vmatprep.subr.mxu0 0.0
    %815 = vmatpush1.msra.mxu0 %v777
    %816 = vmatprep.subr.mxu0 0.0
    %817 = vmatpush1.msra.mxu0 %v778
    %818 = vmatprep.subr.mxu0 0.0
    %819 = vmatpush1.msra.mxu0 0.0
    %820 = vmatprep.subr.mxu0 0.0
    %821 = vmatpush1.msra.mxu0 0.0
    %822 = vmatprep.subr.mxu0 0.0
    %823 = vmatpush1.msra.mxu0 0.0
    %824 = vmatprep.subr.mxu0 0.0
    %825 = vmatpush1.msra.mxu0 0.0
    %826 = vmatprep.subr.mxu0 0.0
    %827 = vmatpush1.msra.mxu0 0.0
    %828 = vmatprep.subr.mxu0 0.0
    %829 = vmatpush1.msra.mxu0 0.0
    %830 = vmatprep.subr.mxu0 0.0
    %831 = vmatpush1.msra.mxu0 0.0
    %832 = vmatprep.subr.mxu0 0.0
    %833 = vmatpush1.msra.mxu0 0.0
    %834 = vmatprep.subr.mxu0 0.0
    %835 = vmatpush1.msra.mxu0 0.0
    %836 = vmatprep.subr.mxu0 0.0
    %837 = vmatpush1.msra.mxu0 0.0
    %838 = vmatprep.subr.mxu0 0.0
    %839 = vmatpush1.msra.mxu0 0.0
    %840 = vmatprep.subr.mxu0 0.0
    %841 = vmatpush1.msra.mxu0 0.0
    %842 = vmatprep.subr.mxu0 0.0
    %843 = vmatpush1.msra.mxu0 0.0
    %844 = vmatprep.subr.mxu0 0.0
    %845 = vmatpush1.msra.mxu0 0.0
    %846 = vmatprep.subr.mxu0 0.0
    %847 = vmatpush1.msra.mxu0 0.0
    %848 = vmatprep.subr.mxu0 0.0
    %849 = vmatpush1.msra.mxu0 0.0
    %850 = vmatprep.mubr.f32.mxu0 0.0
    %851 = vmatmul.mubr.f32.gmra.mrb[0].mxu0 %v762
    %v852 = vpop.f32.mrb[0].mxu0
    %v853 = vadd.f32 %v784, %v852
    %v854 = vpop.f32.mrb[0].mxu0
    %855 = vdwg.mxu0
    %vm856 = vcmask 7168
    %857 = vst.msk [vmem:[#allocation14] sm:$0xff] %vm856, %v853
    // Predicated region
    $region54: #{tpu_custom_call.1} parent=1 // pred_check
      _
    $region55: #{tpu_custom_call.1} parent=1 // pred_check_branch
      %859 = sbr.rel (0) target = $region57
    $region56: #{tpu_custom_call.1} parent=1 // pred_region
      %s861 = ssub.s32 128, 128
      %862 = vsyncadd [#allocation5], %s861
      %s864 = sshll.u32 [#allocation14], 4
      %s865 = int_to_ptr.vmem [resolvable:$true] %s864
      %867 = dma.vmem_to_hbm [thread:$0]  %s865, 128, %s7, [#allocation5]
    $region57: #{tpu_custom_call.1} parent=1 // pred_fallthru
      _
    // Predicated region
    $region58: #{tpu_custom_call.1} parent=1 // pred_check
      _
    $region59: #{tpu_custom_call.1} parent=1 // pred_check_branch
      %869 = sbr.rel (0) target = $region61
    $region60: #{tpu_custom_call.1} parent=1 // pred_region
      %870 = dma.done [#allocation5], 128
    $region61: #{tpu_custom_call.1} parent=1 // pred_fallthru
      _
    %871 = vsyncpa [#allocation4], 1
    %872 = vsyncpa [#allocation7], 1
    %873 = vsyncpa [#allocation10], 1
    %874 = vsyncpa [#allocation13], 1
    %875 = vsyncpa [#allocation5], 1

</llo_original>
